<compile_context>
chip_gen: v7x
topology: tpu7x:2x2x1
jax: 0.10.0
libtpu: 0.0.40
codegen_flags: <defaults>
</compile_context>

<pallas_src>
import jax
import jax.numpy as jnp
from jax.experimental import pallas as pl
from jax.experimental.pallas import tpu as pltpu


def _round_up(n, m):
    return ((n + m - 1) // m) * m


def highway_kernel(x_ref, w_ref, b_ref, o_ref):
    x = x_ref[...]                                       # (tm, Dp), f32
    d = x_ref.shape[1]                                   # Dp (multiple of 128)
    # One fused MXU matmul for both branches: (tm, Dp) @ (Dp, 2*Dp).
    xw = x.astype(w_ref.dtype)                           # f32 or bf16 MXU inputs
    acc = jnp.dot(xw, w_ref[...], preferred_element_type=jnp.float32)
    acc = acc + b_ref[...]                               # (tm, 2*Dp), f32
    h = jnp.maximum(acc[:, :d], 0.0)                     # linear branch: relu
    g = jax.nn.sigmoid(acc[:, d:])                       # gate branch: sigmoid
    o_ref[...] = (h * g + x * (1.0 - g)).astype(o_ref.dtype)


def highway_layer(x, w_linear, b_linear, w_gate, b_gate, *,
                  tm=512, use_bf16_matmul=False):
    """Highway layer. x: (..., D); weights in PyTorch convention (D_out, D_in),
    biases (D,)."""
    orig_shape = x.shape
    D = orig_shape[-1]
    x2 = x.reshape(-1, D)
    N = x2.shape[0]

    # Lane-dense feature dim: pad D up to a multiple of 128.
    Dp = _round_up(D, 128)
    # Row tile: keep it a multiple of 8, never larger than the padded row count.
    tm_eff = min(tm, _round_up(N, 8))
    Np = _round_up(N, tm_eff)

    x_p = jnp.pad(x2, ((0, Np - N), (0, Dp - D)))

    # Fuse [Wl | Wg] into one (Dp, 2*Dp) weight, pre-transposed so the kernel
    # does a plain row-major x @ W; fuse [bl | bg] into one (1, 2*Dp) bias.
    # Zero padding keeps the valid output columns numerically identical.
    wl_t = jnp.pad(w_linear.T, ((0, Dp - D), (0, Dp - D)))
    wg_t = jnp.pad(w_gate.T, ((0, Dp - D), (0, Dp - D)))
    w_fused = jnp.concatenate([wl_t, wg_t], axis=1)                    # (Dp, 2*Dp)
    b_fused = jnp.concatenate(
        [jnp.pad(b_linear, (0, Dp - D)), jnp.pad(b_gate, (0, Dp - D))]
    ).reshape(1, 2 * Dp).astype(jnp.float32)                           # (1, 2*Dp)

    if use_bf16_matmul:
        # bf16 MXU inputs, f32 accumulation (preferred_element_type in kernel).
        w_fused = w_fused.astype(jnp.bfloat16)

    grid = (Np // tm_eff,)
    out = pl.pallas_call(
        highway_kernel,
        out_shape=jax.ShapeDtypeStruct((Np, Dp), x2.dtype),
        grid_spec=pltpu.PrefetchScalarGridSpec(
            num_scalar_prefetch=0,
            grid=grid,
            in_specs=[
                pl.BlockSpec((tm_eff, Dp), lambda i: (i, 0)),      # x row tile
                pl.BlockSpec((Dp, 2 * Dp), lambda i: (0, 0)),      # fused weight
                pl.BlockSpec((1, 2 * Dp), lambda i: (0, 0)),       # fused bias
            ],
            out_specs=pl.BlockSpec((tm_eff, Dp), lambda i: (i, 0)),
        ),
        compiler_params=pltpu.CompilerParams(
            dimension_semantics=("parallel",),
        ),
    )(x_p, w_fused, b_fused)

    return out[:N, :D].reshape(orig_shape)


def highway_reference(x, w_linear, b_linear, w_gate, b_gate):
    """Pure-JAX reference mirroring the PyTorch module."""
    h = jnp.maximum(x @ w_linear.T + b_linear, 0.0)
    p = jax.nn.sigmoid(x @ w_gate.T + b_gate)
    return h * p + x * (1.0 - p)


if __name__ == "__main__":
    key = jax.random.PRNGKey(0)
    k_x, k_wl, k_bl, k_wg, k_bg = jax.random.split(key, 5)

    batch, seq, dim = 2, 8, 32

    # Deterministic synthetic parameters (PyTorch Linear convention: W (out, in), b (out,))
    x = jax.random.normal(k_x, (batch, seq, dim), dtype=jnp.float32)
    w_linear = jax.random.normal(k_wl, (dim, dim), dtype=jnp.float32) * 0.1
    b_linear = jax.random.normal(k_bl, (dim,), dtype=jnp.float32) * 0.1
    w_gate = jax.random.normal(k_wg, (dim, dim), dtype=jnp.float32) * 0.1
    b_gate = jax.random.normal(k_bg, (dim,), dtype=jnp.float32) * 0.1

    y_ref = highway_reference(x, w_linear, b_linear, w_gate, b_gate)

    # f32 MXU path.
    y = highway_layer(x, w_linear, b_linear, w_gate, b_gate)
    y = jax.block_until_ready(y)
    assert y.shape == x.shape
    assert jnp.allclose(y, y_ref, atol=1e-5, rtol=1e-5), "f32 mismatch vs reference"

    # Ragged row count (exercises cdiv-style row padding; no divisibility assert).
    x_ragged = jax.random.normal(k_x, (3, 5, dim), dtype=jnp.float32)
    y_ragged = highway_layer(x_ragged, w_linear, b_linear, w_gate, b_gate)
    y_ragged = jax.block_until_ready(y_ragged)
    y_ragged_ref = highway_reference(x_ragged, w_linear, b_linear, w_gate, b_gate)
    assert jnp.allclose(y_ragged, y_ragged_ref, atol=1e-5, rtol=1e-5), \
        "ragged-N mismatch vs reference"

    # bf16 MXU path (f32 accumulation) — looser tolerance.
    y_bf16 = highway_layer(x, w_linear, b_linear, w_gate, b_gate,
                           use_bf16_matmul=True)
    y_bf16 = jax.block_until_ready(y_bf16)
    assert jnp.allclose(y_bf16, y_ref, atol=1e-1, rtol=1e-1), \
        "bf16 mismatch vs reference"

    print("KERNEL_OK")
</pallas_src>

<mosaic_0001>
module attributes {stable_mosaic.version = 11 : i64} {
  func.func @highway_kernel(%arg0: i32, %arg1: memref<16x128xf32, #tpu.memory_space<vmem>>, %arg2: memref<128x256xf32, #tpu.memory_space<vmem>>, %arg3: memref<1x256xf32, #tpu.memory_space<vmem>>, %arg4: memref<16x128xf32, #tpu.memory_space<vmem>>) attributes {dimension_semantics = [#tpu.dimension_semantics<parallel>], iteration_bounds = array<i64: 1>, scalar_prefetch = 0 : i64, scratch_operands = 0 : i64, tpu.core_type = #tpu.core_type<tc>, window_params = [{transform_indices = @transform_0, window_bounds = array<i64: 16, 128>}, {pipeline_mode = #tpu.pipeline_mode<synchronous>, transform_indices = @transform_1, window_bounds = array<i64: 128, 256>}, {pipeline_mode = #tpu.pipeline_mode<synchronous>, transform_indices = @transform_2, window_bounds = array<i64: 1, 256>}, {transform_indices = @transform_3, window_bounds = array<i64: 16, 128>}]} {
    %c0 = arith.constant 0 : index
    %c0_0 = arith.constant 0 : index
    %0 = vector.load %arg1[%c0, %c0_0] : memref<16x128xf32, #tpu.memory_space<vmem>>, vector<16x128xf32>
    %c0_1 = arith.constant 0 : index
    %c0_2 = arith.constant 0 : index
    %1 = vector.load %arg2[%c0_1, %c0_2] : memref<128x256xf32, #tpu.memory_space<vmem>>, vector<128x256xf32>
    %cst = arith.constant dense<0.000000e+00> : vector<16x256xf32>
    %2 = tpu.matmul %0, %1, %cst {dimension_numbers = #tpu.dot_dimension_numbers<[1], [0], [0], [1], [0, 0, 1, 1], [], []>} : vector<16x128xf32>, vector<128x256xf32>, vector<16x256xf32> -> vector<16x256xf32>
    %c0_3 = arith.constant 0 : index
    %c0_4 = arith.constant 0 : index
    %3 = vector.load %arg3[%c0_3, %c0_4] : memref<1x256xf32, #tpu.memory_space<vmem>>, vector<1x256xf32>
    %4 = vector.broadcast %3 : vector<1x256xf32> to vector<16x256xf32>
    %5 = arith.addf %2, %4 : vector<16x256xf32>
    %6 = vector.extract_strided_slice %5 {offsets = [0, 0], sizes = [16, 128], strides = [1, 1]} : vector<16x256xf32> to vector<16x128xf32>
    %cst_5 = arith.constant 0.000000e+00 : f32
    %7 = vector.broadcast %cst_5 : f32 to vector<16x128xf32>
    %8 = arith.maximumf %6, %7 : vector<16x128xf32>
    %9 = vector.extract_strided_slice %5 {offsets = [0, 128], sizes = [16, 128], strides = [1, 1]} : vector<16x256xf32> to vector<16x128xf32>
    %10 = arith.negf %9 : vector<16x128xf32>
    %11 = math.exp %10 : vector<16x128xf32>
    %cst_6 = arith.constant 1.000000e+00 : f32
    %12 = vector.broadcast %cst_6 : f32 to vector<16x128xf32>
    %13 = arith.addf %12, %11 : vector<16x128xf32>
    %14 = arith.divf %12, %13 : vector<16x128xf32>
    %15 = arith.mulf %8, %14 : vector<16x128xf32>
    %cst_7 = arith.constant 1.000000e+00 : f32
    %16 = vector.broadcast %cst_7 : f32 to vector<16x128xf32>
    %17 = arith.subf %16, %14 : vector<16x128xf32>
    %18 = arith.mulf %0, %17 : vector<16x128xf32>
    %19 = arith.addf %15, %18 : vector<16x128xf32>
    %c0_8 = arith.constant 0 : index
    %c0_9 = arith.constant 0 : index
    %20 = vector.load %arg4[%c0_8, %c0_9] : memref<16x128xf32, #tpu.memory_space<vmem>>, vector<16x128xf32>
    tpu.vector_store %arg4[%c0_8, %c0_9], %19 {strides = array<i32>} : memref<16x128xf32, #tpu.memory_space<vmem>>, vector<16x128xf32>,
    return
  }
  func.func @transform_0(%arg0: i32) -> (i32, i32) {
    %c0_i32 = arith.constant 0 : i32
    %c0_i32_0 = arith.constant 0 : i32
    return %arg0, %c0_i32 : i32, i32
  }
  func.func @transform_1(%arg0: i32) -> (i32, i32) {
    %c0_i32 = arith.constant 0 : i32
    %c0_i32_0 = arith.constant 0 : i32
    %c0_i32_1 = arith.constant 0 : i32
    return %c0_i32, %c0_i32_0 : i32, i32
  }
  func.func @transform_2(%arg0: i32) -> (i32, i32) {
    %c0_i32 = arith.constant 0 : i32
    %c0_i32_0 = arith.constant 0 : i32
    %c0_i32_1 = arith.constant 0 : i32
    return %c0_i32, %c0_i32_0 : i32, i32
  }
  func.func @transform_3(%arg0: i32) -> (i32, i32) {
    %c0_i32 = arith.constant 0 : i32
    %c0_i32_0 = arith.constant 0 : i32
    return %arg0, %c0_i32 : i32, i32
  }
}

</mosaic_0001>

<llo_original>
// kernel: tpu_custom_call.1
$region0: #{tpu_custom_call.1}
  #allocation0 [shape = 'u32[]', space=smem, size = 0x4, offset = 0x4, fixed_abs, tag = 'smem constant byte address 0x4 - core index']
  #allocation1 [shape = 'u32[144,128]{1,0:T(1,128)}', space=vmem, size = 0x12000, scoped, tag = 'internal scratch']
  %s0 = inlined_call_operand.hbm [shape: f32[16,128], index: 0, kind: input, shape index: {}]
  %s1 = inlined_call_operand.hbm [shape: f32[128,256], index: 1, kind: input, shape index: {}]
  %s2 = inlined_call_operand.vmem [shape: f32[1,256], index: 2, kind: input, shape index: {}]
  %s3 = inlined_call_operand.hbm [shape: f32[16,128], index: 3, kind: output, shape index: {}]
  %s4 = sld [smem:[#allocation0]]
  $region30: #{tpu_custom_call.1} parent=0
    _
  %s6 = ssub.s32 1, %s4
  %s7 = scalar_select 0, %s6, %s4
  $region1: #{tpu_custom_call.1} parent=0
    #allocation2 [shape = 'u8[8192]{0}', space=vmem, size = 0x2000, scoped, tag = 'input window, operand 0, single buffered']
    #allocation3 [shape = 's32[1]{0}', space=sflag, size = 0x4, scoped, tag = 'scoped memory for tpu_custom_call.1']
    #allocation4 [shape = 's32[1]{0}', space=sflag, size = 0x4, scoped, tag = 'scoped memory for tpu_custom_call.1']
    #allocation5 [shape = 'u8[131072]{0}', space=vmem, size = 0x20000, scoped, tag = 'input window, operand 1, single buffered']
    #allocation6 [shape = 's32[1]{0}', space=sflag, size = 0x4, scoped, tag = 'scoped memory for tpu_custom_call.1']
    #allocation7 [shape = 'u8[8192]{0}', space=vmem, size = 0x2000, scoped, tag = 'output window, operand 0, single buffered']
    %8 = vsyncpa [#allocation3], 0
    %9 = vsyncpa [#allocation6], 0
    %10 = vsyncpa [#allocation4], 0
    // Predicated region
    $region2: #{tpu_custom_call.1} parent=1 // pred_check
      _
    $region3: #{tpu_custom_call.1} parent=1 // pred_check_branch
      %12 = sbr.rel (0) target = $region5
    $region4: #{tpu_custom_call.1} parent=1 // pred_region
      %s14 = ssub.s32 256, 256
      %15 = vsyncadd [#allocation3], %s14
      %s16 = sshll.u32 [#allocation2], 4
      %s17 = int_to_ptr.vmem [resolvable:$true] %s16
      %22 = dma.hbm_to_vmem [thread:$0]  %s0, 256, %s17, [#allocation3], 128, 128, 8
    $region5: #{tpu_custom_call.1} parent=1 // pred_fallthru
      _
    // Predicated region
    $region6: #{tpu_custom_call.1} parent=1 // pred_check
      _
    $region7: #{tpu_custom_call.1} parent=1 // pred_check_branch
      %24 = sbr.rel (0) target = $region9
    $region8: #{tpu_custom_call.1} parent=1 // pred_region
      %s26 = ssub.s32 4096, 4096
      %27 = vsyncadd [#allocation6], %s26
      %s28 = sshll.u32 [#allocation5], 4
      %s29 = int_to_ptr.vmem [resolvable:$true] %s28
      %34 = dma.hbm_to_vmem [thread:$0]  %s1, 4096, %s29, [#allocation6], 256, 256, 16
    $region9: #{tpu_custom_call.1} parent=1 // pred_fallthru
      _
    // Predicated region
    $region10: #{tpu_custom_call.1} parent=1 // pred_check
      _
    $region11: #{tpu_custom_call.1} parent=1 // pred_check_branch
      %36 = sbr.rel (0) target = $region13
    $region12: #{tpu_custom_call.1} parent=1 // pred_region
      _
    $region13: #{tpu_custom_call.1} parent=1 // pred_fallthru
      _
    // Predicated region
    $region14: #{tpu_custom_call.1} parent=1 // pred_check
      _
    $region15: #{tpu_custom_call.1} parent=1 // pred_check_branch
      %38 = sbr.rel (0) target = $region17
    $region16: #{tpu_custom_call.1} parent=1 // pred_region
      %39 = dma.done [#allocation3], 256
    $region17: #{tpu_custom_call.1} parent=1 // pred_fallthru
      _
    // Predicated region
    $region18: #{tpu_custom_call.1} parent=1 // pred_check
      _
    $region19: #{tpu_custom_call.1} parent=1 // pred_check_branch
      %41 = sbr.rel (0) target = $region21
    $region20: #{tpu_custom_call.1} parent=1 // pred_region
      %42 = dma.done [#allocation6], 4096
    $region21: #{tpu_custom_call.1} parent=1 // pred_fallthru
      _
    %v43 = vld [vmem:[#allocation2] sm:$0xff]
    %v44 = vld [vmem:[#allocation2 + $0x8] sm:$0xff]
    %v45 = vld [vmem:[#allocation5] sm:$0xff]
    %v46 = vld [vmem:[#allocation5 + $0x8] sm:$0xff]
    %v47 = vld [vmem:[#allocation5 + $0x10] sm:$0xff]
    %v48 = vld [vmem:[#allocation5 + $0x18] sm:$0xff]
    %v49 = vld [vmem:[#allocation5 + $0x20] sm:$0xff]
    %v50 = vld [vmem:[#allocation5 + $0x28] sm:$0xff]
    %v51 = vld [vmem:[#allocation5 + $0x30] sm:$0xff]
    %v52 = vld [vmem:[#allocation5 + $0x38] sm:$0xff]
    %v53 = vld [vmem:[#allocation5 + $0x40] sm:$0xff]
    %v54 = vld [vmem:[#allocation5 + $0x48] sm:$0xff]
    %v55 = vld [vmem:[#allocation5 + $0x50] sm:$0xff]
    %v56 = vld [vmem:[#allocation5 + $0x58] sm:$0xff]
    %v57 = vld [vmem:[#allocation5 + $0x60] sm:$0xff]
    %v58 = vld [vmem:[#allocation5 + $0x68] sm:$0xff]
    %v59 = vld [vmem:[#allocation5 + $0x70] sm:$0xff]
    %v60 = vld [vmem:[#allocation5 + $0x78] sm:$0xff]
    %v61 = vld [vmem:[#allocation5 + $0x80] sm:$0xff]
    %v62 = vld [vmem:[#allocation5 + $0x88] sm:$0xff]
    %v63 = vld [vmem:[#allocation5 + $0x90] sm:$0xff]
    %v64 = vld [vmem:[#allocation5 + $0x98] sm:$0xff]
    %v65 = vld [vmem:[#allocation5 + $0xa0] sm:$0xff]
    %v66 = vld [vmem:[#allocation5 + $0xa8] sm:$0xff]
    %v67 = vld [vmem:[#allocation5 + $0xb0] sm:$0xff]
    %v68 = vld [vmem:[#allocation5 + $0xb8] sm:$0xff]
    %v69 = vld [vmem:[#allocation5 + $0xc0] sm:$0xff]
    %v70 = vld [vmem:[#allocation5 + $0xc8] sm:$0xff]
    %v71 = vld [vmem:[#allocation5 + $0xd0] sm:$0xff]
    %v72 = vld [vmem:[#allocation5 + $0xd8] sm:$0xff]
    %v73 = vld [vmem:[#allocation5 + $0xe0] sm:$0xff]
    %v74 = vld [vmem:[#allocation5 + $0xe8] sm:$0xff]
    %v75 = vld [vmem:[#allocation5 + $0xf0] sm:$0xff]
    %v76 = vld [vmem:[#allocation5 + $0xf8] sm:$0xff]
    %v77 = vld [vmem:[%s2] sm:$0x3]
    %v79 = vlaneseq
    %v80 = vshrl.u32 %v79, 7
    %v81 = vsub.s32 0, %v80
    %v82 = vrot.slane %v77, %v81
    %v83 = vlaneseq
    %v84 = vshrl.u32 %v83, 7
    %v85 = vsub.s32 1, %v84
    %v86 = vrot.slane %v77, %v85
    %89 = vmatprep.subr.mxu0 %v46
    %90 = vmatpush1.msra.mxu0 %v45
    %91 = vmatprep.subr.mxu0 %v48
    %92 = vmatpush1.msra.mxu0 %v47
    %93 = vmatprep.subr.mxu0 %v50
    %94 = vmatpush1.msra.mxu0 %v49
    %95 = vmatprep.subr.mxu0 %v52
    %96 = vmatpush1.msra.mxu0 %v51
    %97 = vmatprep.subr.mxu0 %v54
    %98 = vmatpush1.msra.mxu0 %v53
    %99 = vmatprep.subr.mxu0 %v56
    %100 = vmatpush1.msra.mxu0 %v55
    %101 = vmatprep.subr.mxu0 %v58
    %102 = vmatpush1.msra.mxu0 %v57
    %103 = vmatprep.subr.mxu0 %v60
    %104 = vmatpush1.msra.mxu0 %v59
    %105 = vmatprep.subr.mxu0 %v62
    %106 = vmatpush1.msra.mxu0 %v61
    %107 = vmatprep.subr.mxu0 %v64
    %108 = vmatpush1.msra.mxu0 %v63
    %109 = vmatprep.subr.mxu0 %v66
    %110 = vmatpush1.msra.mxu0 %v65
    %111 = vmatprep.subr.mxu0 %v68
    %112 = vmatpush1.msra.mxu0 %v67
    %113 = vmatprep.subr.mxu0 %v70
    %114 = vmatpush1.msra.mxu0 %v69
    %115 = vmatprep.subr.mxu0 %v72
    %116 = vmatpush1.msra.mxu0 %v71
    %117 = vmatprep.subr.mxu0 %v74
    %118 = vmatpush1.msra.mxu0 %v73
    %119 = vmatprep.subr.mxu0 %v76
    %120 = vmatpush1.msra.mxu0 %v75
    %121 = vmatprep.subr.mxu0 0.0
    %122 = vmatpush1.msra.mxu0 0.0
    %123 = vmatprep.subr.mxu0 0.0
    %124 = vmatpush1.msra.mxu0 0.0
    %125 = vmatprep.subr.mxu0 0.0
    %126 = vmatpush1.msra.mxu0 0.0
    %127 = vmatprep.subr.mxu0 0.0
    %128 = vmatpush1.msra.mxu0 0.0
    %129 = vmatprep.subr.mxu0 0.0
    %130 = vmatpush1.msra.mxu0 0.0
    %131 = vmatprep.subr.mxu0 0.0
    %132 = vmatpush1.msra.mxu0 0.0
    %133 = vmatprep.subr.mxu0 0.0
    %134 = vmatpush1.msra.mxu0 0.0
    %135 = vmatprep.subr.mxu0 0.0
    %136 = vmatpush1.msra.mxu0 0.0
    %137 = vmatprep.subr.mxu0 0.0
    %138 = vmatpush1.msra.mxu0 0.0
    %139 = vmatprep.subr.mxu0 0.0
    %140 = vmatpush1.msra.mxu0 0.0
    %141 = vmatprep.subr.mxu0 0.0
    %142 = vmatpush1.msra.mxu0 0.0
    %143 = vmatprep.subr.mxu0 0.0
    %144 = vmatpush1.msra.mxu0 0.0
    %145 = vmatprep.subr.mxu0 0.0
    %146 = vmatpush1.msra.mxu0 0.0
    %147 = vmatprep.subr.mxu0 0.0
    %148 = vmatpush1.msra.mxu0 0.0
    %149 = vmatprep.subr.mxu0 0.0
    %150 = vmatpush1.msra.mxu0 0.0
    %151 = vmatprep.subr.mxu0 0.0
    %152 = vmatpush1.msra.mxu0 0.0
    %153 = vmatprep.mubr.f32.mxu0 0.0
    %154 = vmatmul.mubr.f32.gmra.mrb[0].mxu0 %v43
    %v155 = vpop.f32.mrb[0].mxu0
    %v156 = vadd.f32 %v82, %v155
    %v157 = vpop.f32.mrb[0].mxu0
    %v158 = vadd.f32 %v86, %v157
    %159 = vmatprep.mubr.f32.mxu0 0.0
    %160 = vmatmul.mubr.f32.gmra.mrb[0].mxu0 %v44
    %v161 = vpop.f32.mrb[0].mxu0
    %v162 = vadd.f32 %v82, %v161
    %v163 = vpop.f32.mrb[0].mxu0
    %v164 = vadd.f32 %v86, %v163
    %165 = vdwg.mxu0
    %v166 = vmax.f32 %v156, 0.0
    %v167 = vmax.f32 %v162, 0.0
    %v168 = vxor.u32 %v158, 2147483648
    %v169 = vxor.u32 %v164, 2147483648
    %v170 = vmul.f32 %v168, 1.442695
    %v171 = vpow.pop %v170
    %v172 = vmul.f32 %v169, 1.442695
    %v173 = vpow.pop %v172
    %v174 = vadd.f32 %v171, 1.0
    %v175 = vadd.f32 %v173, 1.0
    %v176 = vrcp.pop %v174
    %v177 = vmul.f32 1.0, %v176
    %v178 = vrcp.pop %v175
    %v179 = vmul.f32 1.0, %v178
    %v180 = vmul.f32 %v166, %v177
    %v181 = vmul.f32 %v167, %v179
    %v182 = vsub.f32 1.0, %v177
    %v183 = vsub.f32 1.0, %v179
    %v184 = vmul.f32 %v43, %v182
    %v185 = vmul.f32 %v44, %v183
    %v186 = vadd.f32 %v180, %v184
    %v187 = vadd.f32 %v181, %v185
    %188 = vst [vmem:[#allocation7] sm:$0xff] %v186
    %189 = vst [vmem:[#allocation7 + $0x8] sm:$0xff] %v187
    // Predicated region
    $region22: #{tpu_custom_call.1} parent=1 // pred_check
      _
    $region23: #{tpu_custom_call.1} parent=1 // pred_check_branch
      %191 = sbr.rel (0) target = $region25
    $region24: #{tpu_custom_call.1} parent=1 // pred_region
      %s193 = ssub.s32 256, 256
      %194 = vsyncadd [#allocation4], %s193
      %s195 = sshll.u32 [#allocation7], 4
      %s196 = int_to_ptr.vmem [resolvable:$true] %s195
      %201 = dma.vmem_to_hbm [thread:$0]  %s196, 256, %s3, [#allocation4], 128, 128, 8
    $region25: #{tpu_custom_call.1} parent=1 // pred_fallthru
      _
    // Predicated region
    $region26: #{tpu_custom_call.1} parent=1 // pred_check
      _
    $region27: #{tpu_custom_call.1} parent=1 // pred_check_branch
      %203 = sbr.rel (0) target = $region29
    $region28: #{tpu_custom_call.1} parent=1 // pred_region
      %204 = dma.done [#allocation4], 256
    $region29: #{tpu_custom_call.1} parent=1 // pred_fallthru
      _
    %205 = vsyncpa [#allocation3], 1
    %206 = vsyncpa [#allocation6], 1
    %207 = vsyncpa [#allocation4], 1

</llo_original>
